<compile_context>
chip_gen: v7x
topology: tpu7x:2x2x1
jax: 0.10.0
libtpu: 0.0.40
codegen_flags: <defaults>
</compile_context>

<pallas_src>
import functools

import jax
import jax.numpy as jnp
from jax import lax
from jax.experimental import pallas as pl
from jax.experimental.pallas import tpu as pltpu


def _pick_tile(dim, cap):
    """Largest tile <= cap that divides dim (keeps BlockSpecs exact, no padding)."""
    t = min(dim, cap)
    while dim % t:
        t -= 1
    return t


# ----------------------------------------------------------------------------
# Tiled linear projection kernel: y = x @ W + b
# ----------------------------------------------------------------------------
def _linear_kernel(x_ref, w_ref, b_ref, o_ref, acc_ref):
    k = pl.program_id(2)

    @pl.when(k == 0)
    def _():
        acc_ref[...] = jnp.zeros_like(acc_ref)

    acc_ref[...] += jnp.dot(x_ref[...], w_ref[...],
                            preferred_element_type=jnp.float32)

    @pl.when(k == pl.num_programs(2) - 1)
    def _():
        o_ref[...] = (acc_ref[...] + b_ref[...].astype(jnp.float32)).astype(o_ref.dtype)


def linear(x2d, w, b, *, tm_cap=256, tn_cap=512, tk_cap=512):
    M, K = x2d.shape
    N = w.shape[1]
    tm = _pick_tile(M, tm_cap)
    tn = _pick_tile(N, tn_cap)
    tk = _pick_tile(K, tk_cap)
    return pl.pallas_call(
        _linear_kernel,
        out_shape=jax.ShapeDtypeStruct((M, N), x2d.dtype),
        grid=(M // tm, N // tn, K // tk),
        in_specs=[
            pl.BlockSpec((tm, tk), lambda i, j, k: (i, k)),
            pl.BlockSpec((tk, tn), lambda i, j, k: (k, j)),
            pl.BlockSpec((1, tn), lambda i, j, k: (0, j)),
        ],
        out_specs=pl.BlockSpec((tm, tn), lambda i, j, k: (i, j)),
        scratch_shapes=[pltpu.VMEM((tm, tn), jnp.float32)],
        compiler_params=pltpu.CompilerParams(
            dimension_semantics=("parallel", "parallel", "arbitrary")
        ),
    )(x2d, w, b.reshape(1, N))


# ----------------------------------------------------------------------------
# Attention kernel: one (batch, q-tile) per grid step, all heads inside.
# ----------------------------------------------------------------------------
def _mha_kernel(*refs, H, d_k, scale, has_mask, mask_per_head):
    if has_mask:
        q_ref, k_ref, v_ref, m_ref, ctx_ref, attn_ref = refs
    else:
        q_ref, k_ref, v_ref, ctx_ref, attn_ref = refs

    k = k_ref[...]  # (Sk, d_model)
    v = v_ref[...]  # (Sk, d_model)

    ctx_parts = []
    for h in range(H):  # static loop over heads (packed along the feature axis)
        lo = h * d_k
        hi = lo + d_k
        # Fold 1/sqrt(d_k) into Q (Sq*d_k mults instead of Sq*Sk divides).
        q_h = q_ref[:, lo:hi].astype(jnp.float32) * scale     # (tq, d_k)
        k_h = k[:, lo:hi]                                     # (Sk, d_k)
        v_h = v[:, lo:hi]                                     # (Sk, d_k)

        # QK^T without an explicit transpose: contract the last dims on the MXU.
        scores = lax.dot_general(
            q_h, k_h, (((1,), (1,)), ((), ())),
            preferred_element_type=jnp.float32,
        )  # (tq, Sk)

        if has_mask:
            m = m_ref[h] if mask_per_head else m_ref[...]
            scores = jnp.where(m == 0, jnp.float32(-1e20), scores)

        # Numerically-stable softmax; divide goes to the EUP via approx reciprocal.
        mx = jnp.max(scores, axis=-1, keepdims=True)
        e = jnp.exp(scores - mx)
        attn = e * pl.reciprocal(jnp.sum(e, axis=-1, keepdims=True), approx=True)

        attn_ref[h] = attn.astype(attn_ref.dtype)
        ctx_parts.append(
            jnp.dot(attn.astype(v_h.dtype), v_h, preferred_element_type=jnp.float32)
        )

    # One lane-dense (tq, d_model) store instead of H narrow column stores.
    ctx_ref[...] = jnp.concatenate(ctx_parts, axis=-1).astype(ctx_ref.dtype)


# ----------------------------------------------------------------------------
# Full MultiHeadAttention forward
# ----------------------------------------------------------------------------
def multi_head_attention(params, Q, K, V, mask=None):
    B, Sq, d_model = Q.shape
    Sk = K.shape[1]
    H = params["num_heads"]
    d_k = d_model // H

    # --- projections -------------------------------------------------------
    if Q is K and K is V:
        # Self-attention: fused QKV projection (x read from HBM once, one kernel).
        w_qkv = jnp.concatenate([params["wq"], params["wk"], params["wv"]], axis=1)
        b_qkv = jnp.concatenate([params["bq"], params["bk"], params["bv"]])
        qkv = linear(Q.reshape(B * Sq, d_model), w_qkv, b_qkv)
        q2d = qkv[:, :d_model]
        k2d = qkv[:, d_model:2 * d_model]
        v2d = qkv[:, 2 * d_model:]
    else:
        q2d = linear(Q.reshape(B * Sq, d_model), params["wq"], params["bq"])
        k2d = linear(K.reshape(B * Sk, d_model), params["wk"], params["bk"])
        v2d = linear(V.reshape(B * Sk, d_model), params["wv"], params["bv"])

    # Heads stay packed along the feature axis; no head-split transposes.
    q = q2d.reshape(B, Sq, d_model)
    k = k2d.reshape(B, Sk, d_model)
    v = v2d.reshape(B, Sk, d_model)

    # q-tile size keeps per-step VMEM bounded (scores/attn block is H*tq*Sk*4B).
    tq = _pick_tile(Sq, 128)

    has_mask = mask is not None
    mask_per_head = False
    mask_args = []
    mask_specs = []
    if has_mask:
        m = jnp.asarray(mask)
        # Mask broadcasts against (B, H, Sq, Sk) aligned from the right.
        mask_per_head = m.ndim >= 3 and m.shape[-3] != 1
        if mask_per_head:
            mask_i8 = (jnp.broadcast_to(m, (B, H, Sq, Sk)) != 0).astype(jnp.int8)
            mask_specs = [pl.BlockSpec((None, H, tq, Sk),
                                       lambda b, qi: (b, 0, qi, 0))]
        else:
            # Shared across heads: ship a single int8 [B, Sq, Sk] mask (no H-fold dup,
            # 4x smaller than f32).
            mask_i8 = (jnp.broadcast_to(m, (B, H, Sq, Sk))[:, 0] != 0).astype(jnp.int8)
            mask_specs = [pl.BlockSpec((None, tq, Sk), lambda b, qi: (b, qi, 0))]
        mask_args = [mask_i8]

    kernel = functools.partial(
        _mha_kernel,
        H=H, d_k=d_k, scale=1.0 / (float(d_k) ** 0.5),
        has_mask=has_mask, mask_per_head=mask_per_head,
    )

    ctx, attn = pl.pallas_call(
        kernel,
        out_shape=(
            jax.ShapeDtypeStruct((B, Sq, d_model), Q.dtype),   # lane-dense ctx
            jax.ShapeDtypeStruct((B, H, Sq, Sk), Q.dtype),     # attention weights
        ),
        grid=(B, Sq // tq),
        in_specs=[
            pl.BlockSpec((None, tq, d_model), lambda b, qi: (b, qi, 0)),
            pl.BlockSpec((None, Sk, d_model), lambda b, qi: (b, 0, 0)),
            pl.BlockSpec((None, Sk, d_model), lambda b, qi: (b, 0, 0)),
            *mask_specs,
        ],
        out_specs=(
            pl.BlockSpec((None, tq, d_model), lambda b, qi: (b, qi, 0)),
            pl.BlockSpec((None, H, tq, Sk), lambda b, qi: (b, 0, qi, 0)),
        ),
        compiler_params=pltpu.CompilerParams(
            dimension_semantics=("parallel", "parallel")
        ),
    )(q, k, v, *mask_args)

    # ctx is already [B, Sq, d_model] — feed W_O directly, no transpose/merge needed.
    out = linear(ctx.reshape(B * Sq, d_model), params["wo"], params["bo"])
    return out.reshape(B, Sq, d_model), attn


# ----------------------------------------------------------------------------
# Deterministic parameter init (PyTorch nn.Linear style: U(-1/sqrt(in), 1/sqrt(in)))
# weights stored as [d_in, d_out] so kernels compute x @ W + b directly.
# ----------------------------------------------------------------------------
def init_params(key, d_model, num_heads):
    bound = 1.0 / jnp.sqrt(jnp.float32(d_model))
    ks = jax.random.split(key, 8)

    def u(k, shape):
        return jax.random.uniform(k, shape, jnp.float32, -bound, bound)

    return {
        "num_heads": num_heads,
        "wq": u(ks[0], (d_model, d_model)), "bq": u(ks[1], (d_model,)),
        "wk": u(ks[2], (d_model, d_model)), "bk": u(ks[3], (d_model,)),
        "wv": u(ks[4], (d_model, d_model)), "bv": u(ks[5], (d_model,)),
        "wo": u(ks[6], (d_model, d_model)), "bo": u(ks[7], (d_model,)),
    }


# ----------------------------------------------------------------------------
# Pure-JAX reference (mirrors the PyTorch forward) for correctness checks
# ----------------------------------------------------------------------------
def reference(params, Q, K, V, mask=None):
    B, Sq, d_model = Q.shape
    Sk = K.shape[1]
    H = params["num_heads"]
    d_k = d_model // H

    def proj(x, w, b):
        return x @ w + b

    q = proj(Q, params["wq"], params["bq"]).reshape(B, Sq, H, d_k).transpose(0, 2, 1, 3)
    k = proj(K, params["wk"], params["bk"]).reshape(B, Sk, H, d_k).transpose(0, 2, 1, 3)
    v = proj(V, params["wv"], params["bv"]).reshape(B, Sk, H, d_k).transpose(0, 2, 1, 3)

    scores = jnp.einsum("bhqd,bhkd->bhqk", q, k) / jnp.sqrt(jnp.float32(d_k))
    if mask is not None:
        scores = jnp.where(mask == 0, -1e20, scores)
    attn = jax.nn.softmax(scores, axis=-1)
    ctx = jnp.einsum("bhqk,bhkd->bhqd", attn, v)
    ctx = ctx.transpose(0, 2, 1, 3).reshape(B, Sq, d_model)
    out = proj(ctx, params["wo"], params["bo"])
    return out, attn


if __name__ == "__main__":
    B, S, d_model, num_heads = 2, 8, 32, 4

    key = jax.random.PRNGKey(0)
    kp, kx, kq, kk, kv = jax.random.split(key, 5)
    params = init_params(kp, d_model, num_heads)

    # Tolerance is slightly loose because the softmax denominator uses the
    # EUP approximate reciprocal (pl.reciprocal(approx=True)).
    TOL = dict(atol=2e-3, rtol=2e-3)

    # --- case 1: self-attention (fused QKV projection path), no mask -------
    x = jax.random.normal(kx, (B, S, d_model), jnp.float32)
    out1, attn1 = multi_head_attention(params, x, x, x, mask=None)
    out1 = jax.block_until_ready(out1)
    attn1 = jax.block_until_ready(attn1)
    out1_ref, attn1_ref = reference(params, x, x, x, mask=None)
    assert out1.shape == (B, S, d_model) and attn1.shape == (B, num_heads, S, S)
    assert jnp.allclose(out1, out1_ref, **TOL)
    assert jnp.allclose(attn1, attn1_ref, **TOL)

    # --- case 2: cross-attention with a (head-shared) causal mask ----------
    Q = jax.random.normal(kq, (B, S, d_model), jnp.float32)
    K = jax.random.normal(kk, (B, S, d_model), jnp.float32)
    V = jax.random.normal(kv, (B, S, d_model), jnp.float32)
    causal = jnp.tril(jnp.ones((S, S), jnp.float32))
    out2, attn2 = multi_head_attention(params, Q, K, V, mask=causal)
    out2 = jax.block_until_ready(out2)
    attn2 = jax.block_until_ready(attn2)
    out2_ref, attn2_ref = reference(params, Q, K, V, mask=causal)
    assert out2.shape == (B, S, d_model) and attn2.shape == (B, num_heads, S, S)
    assert jnp.allclose(out2, out2_ref, **TOL)
    assert jnp.allclose(attn2, attn2_ref, **TOL)

    print("KERNEL_OK")
</pallas_src>

<mosaic_0001>
module attributes {stable_mosaic.version = 11 : i64} {
  func.func @_linear_kernel(%arg0: i32, %arg1: i32, %arg2: i32, %arg3: memref<16x32xf32, #tpu.memory_space<vmem>>, %arg4: memref<32x96xf32, #tpu.memory_space<vmem>>, %arg5: memref<1x96xf32, #tpu.memory_space<vmem>>, %arg6: memref<16x96xf32, #tpu.memory_space<vmem>>, %arg7: memref<16x96xf32, #tpu.memory_space<vmem>>) attributes {dimension_semantics = [#tpu.dimension_semantics<parallel>, #tpu.dimension_semantics<parallel>, #tpu.dimension_semantics<arbitrary>], iteration_bounds = array<i64: 1, 1, 1>, scalar_prefetch = 0 : i64, scratch_operands = 1 : i64, tpu.core_type = #tpu.core_type<tc>, window_params = [{transform_indices = @transform_0, window_bounds = array<i64: 16, 32>}, {transform_indices = @transform_1, window_bounds = array<i64: 32, 96>}, {transform_indices = @transform_2, window_bounds = array<i64: 1, 96>}, {transform_indices = @transform_3, window_bounds = array<i64: 16, 96>}]} {
    %c0_i32 = arith.constant 0 : i32
    %0 = arith.cmpi eq, %arg2, %c0_i32 : i32
    %1 = arith.extui %0 : i1 to i32
    %c0_i32_0 = arith.constant 0 : i32
    %2 = arith.cmpi ne, %1, %c0_i32_0 : i32
    scf.if %2 {
      %cst_10 = arith.constant 0.000000e+00 : f32
      %12 = vector.broadcast %cst_10 : f32 to vector<16x96xf32>
      %c0_11 = arith.constant 0 : index
      %c0_12 = arith.constant 0 : index
      %13 = vector.load %arg7[%c0_11, %c0_12] : memref<16x96xf32, #tpu.memory_space<vmem>>, vector<16x96xf32>
      tpu.vector_store %arg7[%c0_11, %c0_12], %12 {strides = array<i32>} : memref<16x96xf32, #tpu.memory_space<vmem>>, vector<16x96xf32>,
    } else {
    }
    %c0 = arith.constant 0 : index
    %c0_1 = arith.constant 0 : index
    %3 = vector.load %arg7[%c0, %c0_1] : memref<16x96xf32, #tpu.memory_space<vmem>>, vector<16x96xf32>
    %c0_2 = arith.constant 0 : index
    %c0_3 = arith.constant 0 : index
    %4 = vector.load %arg3[%c0_2, %c0_3] : memref<16x32xf32, #tpu.memory_space<vmem>>, vector<16x32xf32>
    %c0_4 = arith.constant 0 : index
    %c0_5 = arith.constant 0 : index
    %5 = vector.load %arg4[%c0_4, %c0_5] : memref<32x96xf32, #tpu.memory_space<vmem>>, vector<32x96xf32>
    %cst = arith.constant dense<0.000000e+00> : vector<16x96xf32>
    %6 = tpu.matmul %4, %5, %cst {dimension_numbers = #tpu.dot_dimension_numbers<[1], [0], [0], [1], [0, 0, 1, 1], [], []>} : vector<16x32xf32>, vector<32x96xf32>, vector<16x96xf32> -> vector<16x96xf32>
    %7 = arith.addf %3, %6 : vector<16x96xf32>
    %c0_6 = arith.constant 0 : index
    %c0_7 = arith.constant 0 : index
    %8 = vector.load %arg7[%c0_6, %c0_7] : memref<16x96xf32, #tpu.memory_space<vmem>>, vector<16x96xf32>
    tpu.vector_store %arg7[%c0_6, %c0_7], %7 {strides = array<i32>} : memref<16x96xf32, #tpu.memory_space<vmem>>, vector<16x96xf32>,
    %c0_i32_8 = arith.constant 0 : i32
    %9 = arith.cmpi eq, %arg2, %c0_i32_8 : i32
    %10 = arith.extui %9 : i1 to i32
    %c0_i32_9 = arith.constant 0 : i32
    %11 = arith.cmpi ne, %10, %c0_i32_9 : i32
    scf.if %11 {
      %c0_10 = arith.constant 0 : index
      %c0_11 = arith.constant 0 : index
      %12 = vector.load %arg7[%c0_10, %c0_11] : memref<16x96xf32, #tpu.memory_space<vmem>>, vector<16x96xf32>
      %c0_12 = arith.constant 0 : index
      %c0_13 = arith.constant 0 : index
      %13 = vector.load %arg5[%c0_12, %c0_13] : memref<1x96xf32, #tpu.memory_space<vmem>>, vector<1x96xf32>
      %14 = vector.broadcast %13 : vector<1x96xf32> to vector<16x96xf32>
      %15 = arith.addf %12, %14 : vector<16x96xf32>
      %c0_14 = arith.constant 0 : index
      %c0_15 = arith.constant 0 : index
      %16 = vector.load %arg6[%c0_14, %c0_15] : memref<16x96xf32, #tpu.memory_space<vmem>>, vector<16x96xf32>
      tpu.vector_store %arg6[%c0_14, %c0_15], %15 {strides = array<i32>} : memref<16x96xf32, #tpu.memory_space<vmem>>, vector<16x96xf32>,
    } else {
    }
    return
  }
  func.func @transform_0(%arg0: i32, %arg1: i32, %arg2: i32) -> (i32, i32) {
    %c0_i32 = arith.constant 0 : i32
    return %arg0, %arg2 : i32, i32
  }
  func.func @transform_1(%arg0: i32, %arg1: i32, %arg2: i32) -> (i32, i32) {
    %c0_i32 = arith.constant 0 : i32
    return %arg2, %arg1 : i32, i32
  }
  func.func @transform_2(%arg0: i32, %arg1: i32, %arg2: i32) -> (i32, i32) {
    %c0_i32 = arith.constant 0 : i32
    %c0_i32_0 = arith.constant 0 : i32
    return %c0_i32, %arg1 : i32, i32
  }
  func.func @transform_3(%arg0: i32, %arg1: i32, %arg2: i32) -> (i32, i32) {
    %c0_i32 = arith.constant 0 : i32
    return %arg0, %arg1 : i32, i32
  }
}

</mosaic_0001>

<llo_original>
// kernel: tpu_custom_call.1
$region0: #{tpu_custom_call.1}
  #allocation0 [shape = 'u32[]', space=smem, size = 0x4, offset = 0x4, fixed_abs, tag = 'smem constant byte address 0x4 - core index']
  #allocation1 [shape = 'u32[144,128]{1,0:T(1,128)}', space=vmem, size = 0x12000, scoped, tag = 'internal scratch']
  #allocation2 [shape = 'f32[16,96]{1,0:T(8,128)}', space=vmem, size = 0x2000, scoped, tag = 'scratch operand']
  %s0 = inlined_call_operand.hbm [shape: f32[16,32], index: 0, kind: input, shape index: {}]
  %s1 = inlined_call_operand.hbm [shape: f32[32,96], index: 1, kind: input, shape index: {}]
  %s2 = inlined_call_operand.vmem [shape: f32[1,96], index: 2, kind: input, shape index: {}]
  %s3 = inlined_call_operand.hbm [shape: f32[16,96], index: 3, kind: output, shape index: {}]
  %s4 = sld [smem:[#allocation0]]
  $region38: #{tpu_custom_call.1} parent=0
    _
  %s6 = ssub.s32 1, %s4
  %s7 = scalar_select 0, %s6, %s4
  $region1: #{tpu_custom_call.1} parent=0
    #allocation3 [shape = 'u8[8192]{0}', space=vmem, size = 0x2000, scoped, tag = 'input window, operand 0, single buffered']
    #allocation4 [shape = 's32[1]{0}', space=sflag, size = 0x4, scoped, tag = 'scoped memory for tpu_custom_call.1']
    #allocation5 [shape = 's32[1]{0}', space=sflag, size = 0x4, scoped, tag = 'scoped memory for tpu_custom_call.1']
    #allocation6 [shape = 'u8[16384]{0}', space=vmem, size = 0x4000, scoped, tag = 'input window, operand 1, single buffered']
    #allocation7 [shape = 's32[1]{0}', space=sflag, size = 0x4, scoped, tag = 'scoped memory for tpu_custom_call.1']
    #allocation8 [shape = 'u8[8192]{0}', space=vmem, size = 0x2000, scoped, tag = 'output window, operand 0, single buffered']
    %8 = vsyncpa [#allocation4], 0
    %9 = vsyncpa [#allocation7], 0
    %10 = vsyncpa [#allocation5], 0
    // Predicated region
    $region2: #{tpu_custom_call.1} parent=1 // pred_check
      _
    $region3: #{tpu_custom_call.1} parent=1 // pred_check_branch
      %12 = sbr.rel (0) target = $region5
    $region4: #{tpu_custom_call.1} parent=1 // pred_region
      %s14 = ssub.s32 256, 256
      %15 = vsyncadd [#allocation4], %s14
      %s16 = sshll.u32 [#allocation3], 4
      %s17 = int_to_ptr.vmem [resolvable:$true] %s16
      %22 = dma.hbm_to_vmem [thread:$0]  %s0, 256, %s17, [#allocation4], 128, 128, 8
    $region5: #{tpu_custom_call.1} parent=1 // pred_fallthru
      _
    // Predicated region
    $region6: #{tpu_custom_call.1} parent=1 // pred_check
      _
    $region7: #{tpu_custom_call.1} parent=1 // pred_check_branch
      %24 = sbr.rel (0) target = $region9
    $region8: #{tpu_custom_call.1} parent=1 // pred_region
      %s26 = ssub.s32 512, 512
      %27 = vsyncadd [#allocation7], %s26
      %s28 = sshll.u32 [#allocation6], 4
      %s29 = int_to_ptr.vmem [resolvable:$true] %s28
      %34 = dma.hbm_to_vmem [thread:$0]  %s1, 512, %s29, [#allocation7], 128, 128, 8
    $region9: #{tpu_custom_call.1} parent=1 // pred_fallthru
      _
    // Predicated region
    $region10: #{tpu_custom_call.1} parent=1 // pred_check
      _
    $region11: #{tpu_custom_call.1} parent=1 // pred_check_branch
      %36 = sbr.rel (0) target = $region13
    $region12: #{tpu_custom_call.1} parent=1 // pred_region
      _
    $region13: #{tpu_custom_call.1} parent=1 // pred_fallthru
      _
    // Predicated region
    $region14: #{tpu_custom_call.1} parent=1 // pred_check
      _
    $region15: #{tpu_custom_call.1} parent=1 // pred_check_branch
      %38 = sbr.rel (0) target = $region17
    $region16: #{tpu_custom_call.1} parent=1 // pred_region
      %39 = dma.done [#allocation4], 256
    $region17: #{tpu_custom_call.1} parent=1 // pred_fallthru
      _
    // Predicated region
    $region18: #{tpu_custom_call.1} parent=1 // pred_check
      _
    $region19: #{tpu_custom_call.1} parent=1 // pred_check_branch
      %41 = sbr.rel (0) target = $region21
    $region20: #{tpu_custom_call.1} parent=1 // pred_region
      %42 = dma.done [#allocation7], 512
    $region21: #{tpu_custom_call.1} parent=1 // pred_fallthru
      _
    %p43 = scmp.eq.s32.totalorder 0, 0
    // Predicated region
    $region22: #{tpu_custom_call.1} parent=1 // pred_check
      %p44 = pneg %p43
    $region23: #{tpu_custom_call.1} parent=1 // pred_check_branch
      %46 = sbr.rel (%p44) target = $region25
    $region24: #{tpu_custom_call.1} parent=1 // pred_region
      %vm47 = vcmask 785408
      %48 = vst.msk [vmem:[#allocation2] sm:$0xff] %vm47, 0.0
      %49 = vst.msk [vmem:[#allocation2 + $0x8] sm:$0xff] %vm47, 0.0
    $region25: #{tpu_custom_call.1} parent=1 // pred_fallthru
      _
    %v50 = vld [vmem:[#allocation2] sm:$0xff]
    %v51 = vld [vmem:[#allocation2 + $0x8] sm:$0xff]
    %v52 = vld [vmem:[#allocation3] sm:$0xff]
    %v53 = vld [vmem:[#allocation3 + $0x8] sm:$0xff]
    %v54 = vld [vmem:[#allocation6] sm:$0xff]
    %v55 = vld [vmem:[#allocation6 + $0x8] sm:$0xff]
    %v56 = vld [vmem:[#allocation6 + $0x10] sm:$0xff]
    %v57 = vld [vmem:[#allocation6 + $0x18] sm:$0xff]
    %vm58 = vcmask 261120
    %v60 = vsel %vm58, %v52, 0
    %v63 = vsel %vm58, %v53, 0
    %65 = vmatprep.subr.mxu0 0.0
    %66 = vmatpush1.msra.mxu0 %v54
    %67 = vmatprep.subr.mxu0 0.0
    %68 = vmatpush1.msra.mxu0 %v55
    %69 = vmatprep.subr.mxu0 0.0
    %70 = vmatpush1.msra.mxu0 %v56
    %71 = vmatprep.subr.mxu0 0.0
    %72 = vmatpush1.msra.mxu0 %v57
    %73 = vmatprep.subr.mxu0 0.0
    %74 = vmatpush1.msra.mxu0 0.0
    %75 = vmatprep.subr.mxu0 0.0
    %76 = vmatpush1.msra.mxu0 0.0
    %77 = vmatprep.subr.mxu0 0.0
    %78 = vmatpush1.msra.mxu0 0.0
    %79 = vmatprep.subr.mxu0 0.0
    %80 = vmatpush1.msra.mxu0 0.0
    %81 = vmatprep.subr.mxu0 0.0
    %82 = vmatpush1.msra.mxu0 0.0
    %83 = vmatprep.subr.mxu0 0.0
    %84 = vmatpush1.msra.mxu0 0.0
    %85 = vmatprep.subr.mxu0 0.0
    %86 = vmatpush1.msra.mxu0 0.0
    %87 = vmatprep.subr.mxu0 0.0
    %88 = vmatpush1.msra.mxu0 0.0
    %89 = vmatprep.subr.mxu0 0.0
    %90 = vmatpush1.msra.mxu0 0.0
    %91 = vmatprep.subr.mxu0 0.0
    %92 = vmatpush1.msra.mxu0 0.0
    %93 = vmatprep.subr.mxu0 0.0
    %94 = vmatpush1.msra.mxu0 0.0
    %95 = vmatprep.subr.mxu0 0.0
    %96 = vmatpush1.msra.mxu0 0.0
    %97 = vmatprep.subr.mxu0 0.0
    %98 = vmatpush1.msra.mxu0 0.0
    %99 = vmatprep.subr.mxu0 0.0
    %100 = vmatpush1.msra.mxu0 0.0
    %101 = vmatprep.subr.mxu0 0.0
    %102 = vmatpush1.msra.mxu0 0.0
    %103 = vmatprep.subr.mxu0 0.0
    %104 = vmatpush1.msra.mxu0 0.0
    %105 = vmatprep.subr.mxu0 0.0
    %106 = vmatpush1.msra.mxu0 0.0
    %107 = vmatprep.subr.mxu0 0.0
    %108 = vmatpush1.msra.mxu0 0.0
    %109 = vmatprep.subr.mxu0 0.0
    %110 = vmatpush1.msra.mxu0 0.0
    %111 = vmatprep.subr.mxu0 0.0
    %112 = vmatpush1.msra.mxu0 0.0
    %113 = vmatprep.subr.mxu0 0.0
    %114 = vmatpush1.msra.mxu0 0.0
    %115 = vmatprep.subr.mxu0 0.0
    %116 = vmatpush1.msra.mxu0 0.0
    %117 = vmatprep.subr.mxu0 0.0
    %118 = vmatpush1.msra.mxu0 0.0
    %119 = vmatprep.subr.mxu0 0.0
    %120 = vmatpush1.msra.mxu0 0.0
    %121 = vmatprep.subr.mxu0 0.0
    %122 = vmatpush1.msra.mxu0 0.0
    %123 = vmatprep.subr.mxu0 0.0
    %124 = vmatpush1.msra.mxu0 0.0
    %125 = vmatprep.subr.mxu0 0.0
    %126 = vmatpush1.msra.mxu0 0.0
    %127 = vmatprep.subr.mxu0 0.0
    %128 = vmatpush1.msra.mxu0 0.0
    %129 = vmatprep.mubr.f32.mxu0 0.0
    %130 = vmatmul.mubr.f32.gmra.mrb[0].mxu0 %v60
    %v131 = vpop.f32.mrb[0].mxu0
    %v132 = vadd.f32 0.0, %v131
    %v133 = vpop.f32.mrb[0].mxu0
    %134 = vmatprep.mubr.f32.mxu0 0.0
    %135 = vmatmul.mubr.f32.gmra.mrb[0].mxu0 %v63
    %v136 = vpop.f32.mrb[0].mxu0
    %v137 = vadd.f32 0.0, %v136
    %v138 = vpop.f32.mrb[0].mxu0
    %139 = vdwg.mxu0
    %v140 = vadd.f32 %v50, %v132
    %v141 = vadd.f32 %v51, %v137
    %vm142 = vcmask 785408
    %143 = vst.msk [vmem:[#allocation2] sm:$0xff] %vm142, %v140
    %144 = vst.msk [vmem:[#allocation2 + $0x8] sm:$0xff] %vm142, %v141
    // Predicated region
    $region26: #{tpu_custom_call.1} parent=1 // pred_check
      %p145 = pneg %p43
    $region27: #{tpu_custom_call.1} parent=1 // pred_check_branch
      %147 = sbr.rel (%p145) target = $region29
    $region28: #{tpu_custom_call.1} parent=1 // pred_region
      %v148 = vld [vmem:[#allocation2] sm:$0xff]
      %v149 = vld [vmem:[#allocation2 + $0x8] sm:$0xff]
      %v150 = vld [vmem:[%s2] sm:$0x1]
      %v152 = vlaneseq
      %v153 = vshrl.u32 %v152, 7
      %v154 = vsub.s32 0, %v153
      %v155 = vrot.slane %v150, %v154
      %v157 = vadd.f32 %v148, %v155
      %v158 = vadd.f32 %v149, %v155
      %159 = vst.msk [vmem:[#allocation8] sm:$0xff] %vm142, %v157
      %160 = vst.msk [vmem:[#allocation8 + $0x8] sm:$0xff] %vm142, %v158
    $region29: #{tpu_custom_call.1} parent=1 // pred_fallthru
      _
    // Predicated region
    $region30: #{tpu_custom_call.1} parent=1 // pred_check
      _
    $region31: #{tpu_custom_call.1} parent=1 // pred_check_branch
      %162 = sbr.rel (0) target = $region33
    $region32: #{tpu_custom_call.1} parent=1 // pred_region
      %s164 = ssub.s32 256, 256
      %165 = vsyncadd [#allocation5], %s164
      %s166 = sshll.u32 [#allocation8], 4
      %s167 = int_to_ptr.vmem [resolvable:$true] %s166
      %172 = dma.vmem_to_hbm [thread:$0]  %s167, 256, %s3, [#allocation5], 128, 128, 8
    $region33: #{tpu_custom_call.1} parent=1 // pred_fallthru
      _
    // Predicated region
    $region34: #{tpu_custom_call.1} parent=1 // pred_check
      _
    $region35: #{tpu_custom_call.1} parent=1 // pred_check_branch
      %174 = sbr.rel (0) target = $region37
    $region36: #{tpu_custom_call.1} parent=1 // pred_region
      %175 = dma.done [#allocation5], 256
    $region37: #{tpu_custom_call.1} parent=1 // pred_fallthru
      _
    %176 = vsyncpa [#allocation4], 1
    %177 = vsyncpa [#allocation7], 1
    %178 = vsyncpa [#allocation5], 1

</llo_original>
